<compile_context>
chip_gen: v7x
topology: tpu7x:2x2x1
jax: 0.10.0
libtpu: 0.0.40
codegen_flags: <defaults>
</compile_context>

<pallas_src>
import functools

import jax
import jax.numpy as jnp
from jax.experimental import pallas as pl
from jax.experimental.pallas import tpu as pltpu


# ---------------------------------------------------------------------------
# Elementwise transform bodies (traced inside the fused kernel)
# ---------------------------------------------------------------------------
def identity(x):                       # nn.Identity()
    return x


def scale(factor):                     # example custom transform
    def fn(x):
        return x * jnp.asarray(factor, dtype=x.dtype)
    return fn


# ---------------------------------------------------------------------------
# Fused kernel: predicate (scalar path) + branch select + transform
# ---------------------------------------------------------------------------
def _fused_kernel(u_ref, x_ref, o_ref, *, probability, fn1, fn2):
    # torch.rand(1) < probability, computed on the scalar ALU from SMEM.
    pred = u_ref[0] < jnp.float32(probability)

    @pl.when(pred)
    def _():
        o_ref[...] = fn1(x_ref[...]).astype(o_ref.dtype)

    @pl.when(jnp.logical_not(pred))
    def _():
        o_ref[...] = fn2(x_ref[...]).astype(o_ref.dtype)


def _lane_dense_shape(shape):
    total = 1
    for d in shape:
        total *= d
    if total % 128 == 0:
        return (total // 128, 128)     # lane-dense: last dim = 128 lanes
    return (1, total)                  # fallback: single row


# ---------------------------------------------------------------------------
# RandomTransform wrapper
# ---------------------------------------------------------------------------
class RandomTransform:
    def __init__(self, probability: float, transform1=None, transform2=None):
        self.transform1 = identity if transform1 is None else transform1
        self.transform2 = identity if transform2 is None else transform2
        self.probability = float(probability)

    def __call__(self, x, key):
        # Both branches Identity -> output is x regardless of the draw:
        # skip the kernel launch and the HBM round trip entirely.
        if self.transform1 is identity and self.transform2 is identity:
            return x

        # torch.rand(1) equivalent (uniform [0,1) scalar).
        u = jax.random.uniform(key, (1,), dtype=jnp.float32)

        shape2d = _lane_dense_shape(x.shape)
        x2d = x.reshape(shape2d)

        kernel = functools.partial(
            _fused_kernel,
            probability=self.probability,
            fn1=self.transform1,
            fn2=self.transform2,
        )
        out2d = pl.pallas_call(
            kernel,
            in_specs=[
                pl.BlockSpec(memory_space=pltpu.MemorySpace.SMEM),  # u (1,)
                pl.BlockSpec(memory_space=pltpu.MemorySpace.VMEM),  # x, full block
            ],
            out_specs=pl.BlockSpec(memory_space=pltpu.MemorySpace.VMEM),
            out_shape=jax.ShapeDtypeStruct(shape2d, x.dtype),
        )(u, x2d)
        return out2d.reshape(x.shape)


# ---------------------------------------------------------------------------
# Demo / smoke test
# ---------------------------------------------------------------------------
if __name__ == "__main__":
    key = jax.random.PRNGKey(0)
    kx, kdraw = jax.random.split(key)
    x = jax.random.normal(kx, (2, 4, 16, 16), dtype=jnp.float32)  # NCHW

    # Default module: both transforms are Identity -> output must equal x
    # (wrapper short-circuit; no kernel launch needed).
    rt_default = RandomTransform(probability=0.5)
    y_default = jax.block_until_ready(rt_default(x, kdraw))
    assert y_default.shape == x.shape and y_default.dtype == x.dtype
    assert bool(jnp.allclose(y_default, x))

    # Custom transforms -> fused Pallas kernel picks exactly one branch,
    # consistent with the drawn uniform.
    rt_custom = RandomTransform(0.5, scale(2.0), scale(-1.0))
    y_custom = jax.block_until_ready(rt_custom(x, kdraw))
    u = float(jax.random.uniform(kdraw, (1,), dtype=jnp.float32)[0])
    expected = 2.0 * x if u < 0.5 else -x
    assert bool(jnp.allclose(y_custom, expected))

    # probability=1.0 / 0.0 force branch 1 / branch 2 deterministically.
    y_t1 = jax.block_until_ready(RandomTransform(1.0, scale(2.0), scale(-1.0))(x, kdraw))
    y_t2 = jax.block_until_ready(RandomTransform(0.0, scale(2.0), scale(-1.0))(x, kdraw))
    assert bool(jnp.allclose(y_t1, 2.0 * x))
    assert bool(jnp.allclose(y_t2, -x))

    print("KERNEL_OK")
</pallas_src>

<mosaic_0001>
module attributes {stable_mosaic.version = 11 : i64} {
  func.func @_fused_kernel(%arg0: memref<1xf32, #tpu.memory_space<smem>>, %arg1: memref<16x128xf32, #tpu.memory_space<vmem>>, %arg2: memref<16x128xf32, #tpu.memory_space<vmem>>) attributes {dimension_semantics = [], scalar_prefetch = 0 : i64, scratch_operands = 0 : i64, tpu.core_type = #tpu.core_type<tc>} {
    %c0 = arith.constant 0 : index
    %0 = memref.load %arg0[%c0] : memref<1xf32, #tpu.memory_space<smem>>
    %cst = arith.constant 5.000000e-01 : f32
    %1 = arith.cmpf olt, %0, %cst : f32
    %2 = arith.extui %1 : i1 to i32
    %c0_i32 = arith.constant 0 : i32
    %3 = arith.cmpi ne, %2, %c0_i32 : i32
    scf.if %3 {
      %c0_1 = arith.constant 0 : index
      %c0_2 = arith.constant 0 : index
      %7 = vector.load %arg1[%c0_1, %c0_2] : memref<16x128xf32, #tpu.memory_space<vmem>>, vector<16x128xf32>
      %cst_3 = arith.constant 2.000000e+00 : f32
      %8 = vector.broadcast %cst_3 : f32 to vector<16x128xf32>
      %9 = arith.mulf %7, %8 : vector<16x128xf32>
      %c0_4 = arith.constant 0 : index
      %c0_5 = arith.constant 0 : index
      %10 = vector.load %arg2[%c0_4, %c0_5] : memref<16x128xf32, #tpu.memory_space<vmem>>, vector<16x128xf32>
      tpu.vector_store %arg2[%c0_4, %c0_5], %9 {strides = array<i32>} : memref<16x128xf32, #tpu.memory_space<vmem>>, vector<16x128xf32>,
    } else {
    }
    %true = arith.constant true
    %4 = arith.xori %1, %true : i1
    %5 = arith.extui %4 : i1 to i32
    %c0_i32_0 = arith.constant 0 : i32
    %6 = arith.cmpi ne, %5, %c0_i32_0 : i32
    scf.if %6 {
      %c0_1 = arith.constant 0 : index
      %c0_2 = arith.constant 0 : index
      %7 = vector.load %arg1[%c0_1, %c0_2] : memref<16x128xf32, #tpu.memory_space<vmem>>, vector<16x128xf32>
      %cst_3 = arith.constant -1.000000e+00 : f32
      %8 = vector.broadcast %cst_3 : f32 to vector<16x128xf32>
      %9 = arith.mulf %7, %8 : vector<16x128xf32>
      %c0_4 = arith.constant 0 : index
      %c0_5 = arith.constant 0 : index
      %10 = vector.load %arg2[%c0_4, %c0_5] : memref<16x128xf32, #tpu.memory_space<vmem>>, vector<16x128xf32>
      tpu.vector_store %arg2[%c0_4, %c0_5], %9 {strides = array<i32>} : memref<16x128xf32, #tpu.memory_space<vmem>>, vector<16x128xf32>,
    } else {
    }
    return
  }
}

</mosaic_0001>

<llo_original>
// kernel: tpu_custom_call.1
$region0: #{tpu_custom_call.1}
  #allocation0 [shape = 'u32[]', space=smem, size = 0x4, offset = 0x4, fixed_abs, tag = 'smem constant byte address 0x4 - core index']
  #allocation1 [shape = 'u32[144,128]{1,0:T(1,128)}', space=vmem, size = 0x12000, scoped, tag = 'internal scratch']
  #allocation2 [shape = 'f32[1]{0:T(128)S(6)}', space=smem, size = 0x200, scoped, tag = 'scoped memory for tpu_custom_call.1']
  %s0 = inlined_call_operand.<no memory space> [shape: f32[1], index: 0, kind: input, shape index: {}]
  %s1 = inlined_call_operand.hbm [shape: f32[16,128], index: 1, kind: input, shape index: {}]
  %s2 = inlined_call_operand.hbm [shape: f32[16,128], index: 2, kind: output, shape index: {}]
  %s3 = sld [smem:[#allocation0]]
  $region30: #{tpu_custom_call.1} parent=0
    _
  %s5 = ssub.s32 1, %s3
  %s6 = scalar_select 0, %s5, %s3
  %7 = sst [smem:[#allocation2]] %s0
  $region1: #{tpu_custom_call.1} parent=0
    #allocation3 [shape = 'u8[8192]{0}', space=vmem, size = 0x2000, scoped, tag = 'input window, operand 1, single buffered']
    #allocation4 [shape = 's32[1]{0}', space=sflag, size = 0x4, scoped, tag = 'scoped memory for tpu_custom_call.1']
    #allocation5 [shape = 's32[1]{0}', space=sflag, size = 0x4, scoped, tag = 'scoped memory for tpu_custom_call.1']
    #allocation6 [shape = 'u8[8192]{0}', space=vmem, size = 0x2000, scoped, tag = 'output window, operand 0, single buffered']
    %8 = vsyncpa [#allocation4], 0
    %9 = vsyncpa [#allocation5], 0
    // Predicated region
    $region2: #{tpu_custom_call.1} parent=1 // pred_check
      _
    $region3: #{tpu_custom_call.1} parent=1 // pred_check_branch
      %11 = sbr.rel (0) target = $region5
    $region4: #{tpu_custom_call.1} parent=1 // pred_region
      _
    $region5: #{tpu_custom_call.1} parent=1 // pred_fallthru
      _
    // Predicated region
    $region6: #{tpu_custom_call.1} parent=1 // pred_check
      _
    $region7: #{tpu_custom_call.1} parent=1 // pred_check_branch
      %13 = sbr.rel (0) target = $region9
    $region8: #{tpu_custom_call.1} parent=1 // pred_region
      %s15 = ssub.s32 256, 256
      %16 = vsyncadd [#allocation4], %s15
      %s17 = sshll.u32 [#allocation3], 4
      %s18 = int_to_ptr.vmem [resolvable:$true] %s17
      %23 = dma.hbm_to_vmem [thread:$0]  %s1, 256, %s18, [#allocation4], 128, 128, 8
    $region9: #{tpu_custom_call.1} parent=1 // pred_fallthru
      _
    // Predicated region
    $region10: #{tpu_custom_call.1} parent=1 // pred_check
      _
    $region11: #{tpu_custom_call.1} parent=1 // pred_check_branch
      %25 = sbr.rel (0) target = $region13
    $region12: #{tpu_custom_call.1} parent=1 // pred_region
      %26 = dma.done [#allocation4], 256
    $region13: #{tpu_custom_call.1} parent=1 // pred_fallthru
      _
    %s27 = sld [smem:[#allocation2]]
    %p28 = scmp.lt.f32.partialorder %s27, 0.5
    // Predicated region
    $region14: #{tpu_custom_call.1} parent=1 // pred_check
      %p29 = pneg %p28
    $region15: #{tpu_custom_call.1} parent=1 // pred_check_branch
      %31 = sbr.rel (%p29) target = $region17
    $region16: #{tpu_custom_call.1} parent=1 // pred_region
      %v32 = vld [vmem:[#allocation3] sm:$0xff]
      %v33 = vld [vmem:[#allocation3 + $0x8] sm:$0xff]
      %v34 = vmul.f32 %v32, 2.0
      %v35 = vmul.f32 %v33, 2.0
      %36 = vst [vmem:[#allocation6] sm:$0xff] %v34
      %37 = vst [vmem:[#allocation6 + $0x8] sm:$0xff] %v35
    $region17: #{tpu_custom_call.1} parent=1 // pred_fallthru
      _
    %p38 = pneg %p28
    // Predicated region
    $region18: #{tpu_custom_call.1} parent=1 // pred_check
      _
    $region19: #{tpu_custom_call.1} parent=1 // pred_check_branch
      %40 = sbr.rel (%p28) target = $region21
    $region20: #{tpu_custom_call.1} parent=1 // pred_region
      %v41 = vld [vmem:[#allocation3] sm:$0xff]
      %v42 = vld [vmem:[#allocation3 + $0x8] sm:$0xff]
      %v43 = vmul.f32 %v41, -1.0
      %v44 = vmul.f32 %v42, -1.0
      %45 = vst [vmem:[#allocation6] sm:$0xff] %v43
      %46 = vst [vmem:[#allocation6 + $0x8] sm:$0xff] %v44
    $region21: #{tpu_custom_call.1} parent=1 // pred_fallthru
      _
    // Predicated region
    $region22: #{tpu_custom_call.1} parent=1 // pred_check
      _
    $region23: #{tpu_custom_call.1} parent=1 // pred_check_branch
      %48 = sbr.rel (0) target = $region25
    $region24: #{tpu_custom_call.1} parent=1 // pred_region
      %s50 = ssub.s32 256, 256
      %51 = vsyncadd [#allocation5], %s50
      %s52 = sshll.u32 [#allocation6], 4
      %s53 = int_to_ptr.vmem [resolvable:$true] %s52
      %58 = dma.vmem_to_hbm [thread:$0]  %s53, 256, %s2, [#allocation5], 128, 128, 8
    $region25: #{tpu_custom_call.1} parent=1 // pred_fallthru
      _
    // Predicated region
    $region26: #{tpu_custom_call.1} parent=1 // pred_check
      _
    $region27: #{tpu_custom_call.1} parent=1 // pred_check_branch
      %60 = sbr.rel (0) target = $region29
    $region28: #{tpu_custom_call.1} parent=1 // pred_region
      %61 = dma.done [#allocation5], 256
    $region29: #{tpu_custom_call.1} parent=1 // pred_fallthru
      _
    %62 = vsyncpa [#allocation4], 1
    %63 = vsyncpa [#allocation5], 1

</llo_original>
